<compile_context>
chip_gen: v6e
topology: v6e:2x2x1
jax: 0.10.0
libtpu: 0.0.40
codegen_flags: <defaults>
</compile_context>

<pallas_src>
import functools

import jax
import jax.numpy as jnp
from jax import lax
from jax.experimental import pallas as pl
from jax.experimental.pallas import tpu as pltpu


def _focal_loss_kernel(logits_ref, targets_ref, partial_ref, *,
                       gamma, n_valid, tile_n, ragged):
    """One tile: stable CE + focal weighting; per-tile partial sum to SMEM.

    logits_ref : (C, tile_n) block, samples on the lane axis.
    targets_ref: (1, tile_n) int32 block.
    partial_ref: (1, 1) SMEM block of the (num_tiles, 1) partial-sum output.
    alpha and the mean-divisor are folded into the final JAX-side scale.
    """
    i = pl.program_id(0)

    logits = logits_ref[...].astype(jnp.float32)           # (C, tile_n)
    tgt = targets_ref[...]                                  # (1, tile_n) int32

    # One-hot gather of the target logit (sublane-axis select, no dyn gather).
    class_ids = lax.broadcasted_iota(jnp.int32, logits.shape, 0)
    one_hot = (class_ids == tgt).astype(jnp.float32)        # (C, tile_n)
    tgt_logit = jnp.sum(logits * one_hot, axis=0, keepdims=True)   # (1, tile_n)

    # Numerically stable log-sum-exp -> per-sample cross entropy.
    m = jnp.max(logits, axis=0, keepdims=True)
    lse = m + jnp.log(jnp.sum(jnp.exp(logits - m), axis=0, keepdims=True))
    ce = lse - tgt_logit                                     # (1, tile_n)

    pt = jnp.exp(-ce)
    w = jnp.maximum(1.0 - pt, 0.0)       # clamp: avoid NaN when ce rounds < 0
    if gamma == 2.0:                     # default: two VPU muls, no pow
        focal = w * w * ce
    elif gamma == 1.0:
        focal = w * ce
    elif gamma == 0.0:
        focal = ce
    else:
        focal = jnp.power(w, gamma) * ce

    if ragged:
        # Only the last tile can be ragged; its pad columns hold unspecified
        # data (no explicit HBM pad) -> mask before the reduce.
        col = i * tile_n + lax.broadcasted_iota(jnp.int32, focal.shape, 1)
        focal = jnp.where(col < n_valid, focal, 0.0)

    partial_ref[0, 0] = jnp.sum(focal)


def focal_loss(logits, targets, alpha=0.25, gamma=2.0, reduction="mean",
               tile_n=None):
    """Focal loss matching the PyTorch FocalLoss module.

    logits : (N, C) float array (f32 or bf16)
    targets: (N,)   integer class indices
    """
    n, c = logits.shape
    # TODO(synk): reduction='none' (per-sample output) not implemented; module default is 'mean'.
    assert reduction in ("mean", "sum")

    # ---- VMEM-budget-driven tile size (generation-aware). ----
    try:
        vmem_cap = int(pltpu.get_tpu_info().vmem_capacity_bytes)
    except Exception:
        vmem_cap = 64 << 20              # conservative (v7x-sized) fallback
    budget = max(16 << 20, int(vmem_cap * 0.65))

    in_bytes = logits.dtype.itemsize
    # double-buffered logits + targets blocks, ~5 live (C, t) f32 temporaries,
    # ~10 (1, t) f32 row temporaries.
    per_sample = 2 * c * in_bytes + 2 * 4 + 5 * c * 4 + 10 * 4

    if tile_n is None:
        tile_n = budget // per_sample
    tile_n = int(tile_n)
    tile_n = max(128, min(tile_n, 1 << 17))
    tile_n = (tile_n // 128) * 128
    tile_n = min(tile_n, pl.cdiv(n, 128) * 128)

    num_tiles = pl.cdiv(n, tile_n)
    ragged = (num_tiles * tile_n != n)

    vmem_limit = int(min(vmem_cap * 0.9,
                         max(per_sample * tile_n * 1.25, 32 << 20)))

    # Lane-dense layout: samples on the 128-lane axis. No explicit pad.
    logits_t = jnp.transpose(logits, (1, 0))                 # (C, N)
    targets2d = targets.astype(jnp.int32).reshape(1, n)      # (1, N)

    kernel = functools.partial(
        _focal_loss_kernel, gamma=float(gamma), n_valid=n,
        tile_n=tile_n, ragged=ragged)

    partials = pl.pallas_call(
        kernel,
        out_shape=jax.ShapeDtypeStruct((num_tiles, 1), jnp.float32),
        grid_spec=pltpu.PrefetchScalarGridSpec(
            num_scalar_prefetch=0,
            grid=(num_tiles,),
            in_specs=[
                pl.BlockSpec((c, tile_n), lambda i: (0, i)),
                pl.BlockSpec((1, tile_n), lambda i: (0, i)),
            ],
            out_specs=pl.BlockSpec(
                (1, 1), lambda i: (i, 0), memory_space=pltpu.SMEM),
        ),
        compiler_params=pltpu.CompilerParams(
            dimension_semantics=("parallel",),
            vmem_limit_bytes=vmem_limit,
            allow_input_fusion=[True, False],
        ),
    )(logits_t, targets2d)

    divisor = float(n) if reduction == "mean" else 1.0
    return jnp.sum(partials) * jnp.float32(alpha / divisor)


def _focal_loss_ref(logits, targets, alpha=0.25, gamma=2.0, reduction="mean"):
    """Pure-JAX reference mirroring torch cross_entropy + focal weighting."""
    logits = logits.astype(jnp.float32)
    lse = jax.scipy.special.logsumexp(logits, axis=-1)
    tgt_logit = jnp.take_along_axis(logits, targets[:, None], axis=-1)[:, 0]
    ce = lse - tgt_logit
    pt = jnp.exp(-ce)
    fl = alpha * (1.0 - pt) ** gamma * ce
    if reduction == "mean":
        return fl.mean()
    elif reduction == "sum":
        return fl.sum()
    return fl


if __name__ == "__main__":
    key = jax.random.PRNGKey(0)
    k1, k2, k3, k4, k5, k6 = jax.random.split(key, 6)

    # Case 1: single tile, lane-aligned, default alpha/gamma, 'mean'.
    N, C = 128, 8
    logits = jax.random.normal(k1, (N, C), dtype=jnp.float32) * 2.0
    targets = jax.random.randint(k2, (N,), 0, C, dtype=jnp.int32)
    loss = jax.block_until_ready(focal_loss(logits, targets, 0.25, 2.0, "mean"))
    ref = _focal_loss_ref(logits, targets, 0.25, 2.0, "mean")
    assert jnp.allclose(loss, ref, rtol=1e-5, atol=1e-6), (loss, ref)

    # Case 2: ragged N, forced multi-tile (no-pad OOB-read path), 'sum',
    # non-default gamma.
    N2, C2 = 300, 8
    logits2 = jax.random.normal(k3, (N2, C2), dtype=jnp.float32) * 2.0
    targets2 = jax.random.randint(k4, (N2,), 0, C2, dtype=jnp.int32)
    loss2 = jax.block_until_ready(
        focal_loss(logits2, targets2, 0.5, 1.5, "sum", tile_n=128))
    ref2 = _focal_loss_ref(logits2, targets2, 0.5, 1.5, "sum")
    assert jnp.allclose(loss2, ref2, rtol=1e-5, atol=1e-5), (loss2, ref2)

    # Case 3: bf16 logits, class count not a multiple of 8, 'mean'.
    N3, C3 = 200, 5
    logits3 = (jax.random.normal(k5, (N3, C3), dtype=jnp.float32) * 2.0
               ).astype(jnp.bfloat16)
    targets3 = jax.random.randint(k6, (N3,), 0, C3, dtype=jnp.int32)
    loss3 = jax.block_until_ready(
        focal_loss(logits3, targets3, 0.25, 2.0, "mean"))
    ref3 = _focal_loss_ref(logits3, targets3, 0.25, 2.0, "mean")
    assert jnp.allclose(loss3, ref3, rtol=5e-4, atol=1e-5), (loss3, ref3)

    print("KERNEL_OK")
</pallas_src>

<mosaic_0001>
module attributes {stable_mosaic.version = 11 : i64} {
  func.func @_focal_loss_kernel(%arg0: i32, %arg1: memref<8x128xf32, #tpu.memory_space<vmem>>, %arg2: memref<1x128xi32, #tpu.memory_space<vmem>>, %arg3: memref<1x1xf32, #tpu.memory_space<smem>>) attributes {dimension_semantics = [#tpu.dimension_semantics<parallel>], iteration_bounds = array<i64: 1>, scalar_prefetch = 0 : i64, scratch_operands = 0 : i64, tpu.core_type = #tpu.core_type<tc>, window_params = [{transform_indices = @transform_0, window_bounds = array<i64: 8, 128>}, {transform_indices = @transform_1, window_bounds = array<i64: 1, 128>}, {transform_indices = @transform_2, window_bounds = array<i64: 1, 1>}]} {
    %c0 = arith.constant 0 : index
    %c0_0 = arith.constant 0 : index
    %0 = vector.load %arg1[%c0, %c0_0] : memref<8x128xf32, #tpu.memory_space<vmem>>, vector<8x128xf32>
    %c0_1 = arith.constant 0 : index
    %c0_2 = arith.constant 0 : index
    %1 = vector.load %arg2[%c0_1, %c0_2] : memref<1x128xi32, #tpu.memory_space<vmem>>, vector<1x128xi32>
    %2 = tpu.iota {dimensions = array<i32: 0>} : vector<8x128xi32>
    %3 = vector.broadcast %1 : vector<1x128xi32> to vector<8x128xi32>
    %4 = arith.cmpi eq, %2, %3 : vector<8x128xi32>
    %5 = arith.extui %4 : vector<8x128xi1> to vector<8x128xi32>
    %6 = arith.sitofp %5 : vector<8x128xi32> to vector<8x128xf32>
    %7 = arith.mulf %0, %6 : vector<8x128xf32>
    %cst = arith.constant dense<0.000000e+00> : vector<128xf32>
    %8 = vector.multi_reduction <add>, %7, %cst [0] : vector<8x128xf32> to vector<128xf32>
    %9 = vector.shape_cast %8 : vector<128xf32> to vector<1x128xf32>
    %cst_3 = arith.constant dense<0xFF800000> : vector<128xf32>
    %10 = vector.multi_reduction <maximumf>, %0, %cst_3 [0] : vector<8x128xf32> to vector<128xf32>
    %11 = vector.shape_cast %10 : vector<128xf32> to vector<1x128xf32>
    %12 = vector.broadcast %11 : vector<1x128xf32> to vector<8x128xf32>
    %13 = arith.subf %0, %12 : vector<8x128xf32>
    %14 = math.exp %13 : vector<8x128xf32>
    %cst_4 = arith.constant dense<0.000000e+00> : vector<128xf32>
    %15 = vector.multi_reduction <add>, %14, %cst_4 [0] : vector<8x128xf32> to vector<128xf32>
    %16 = vector.shape_cast %15 : vector<128xf32> to vector<1x128xf32>
    %17 = math.log %16 : vector<1x128xf32>
    %18 = arith.addf %11, %17 : vector<1x128xf32>
    %19 = arith.subf %18, %9 : vector<1x128xf32>
    %cst_5 = arith.constant 0.000000e+00 : f32
    %20 = vector.broadcast %cst_5 : f32 to vector<1x128xf32>
    %21 = arith.subf %20, %19 : vector<1x128xf32>
    %22 = math.exp %21 : vector<1x128xf32>
    %cst_6 = arith.constant 1.000000e+00 : f32
    %23 = vector.broadcast %cst_6 : f32 to vector<1x128xf32>
    %24 = arith.subf %23, %22 : vector<1x128xf32>
    %cst_7 = arith.constant 0.000000e+00 : f32
    %25 = vector.broadcast %cst_7 : f32 to vector<1x128xf32>
    %26 = arith.maximumf %24, %25 : vector<1x128xf32>
    %27 = arith.mulf %26, %26 : vector<1x128xf32>
    %28 = arith.mulf %27, %19 : vector<1x128xf32>
    %29 = vector.shape_cast %28 : vector<1x128xf32> to vector<1x1x128xf32>
    %cst_8 = arith.constant dense<0.000000e+00> : vector<1xf32>
    %30 = vector.multi_reduction <add>, %29, %cst_8 [1, 2] : vector<1x1x128xf32> to vector<1xf32>
    %31 = vector.shape_cast %30 : vector<1xf32> to vector<1x1x1xf32>
    %32 = vector.extract %31[0, 0, 0] : f32 from vector<1x1x1xf32>
    %c0_9 = arith.constant 0 : index
    %c0_10 = arith.constant 0 : index
    %33 = memref.load %arg3[%c0_9, %c0_10] : memref<1x1xf32, #tpu.memory_space<smem>>
    memref.store %32, %arg3[%c0_9, %c0_10] : memref<1x1xf32, #tpu.memory_space<smem>>
    return
  }
  func.func @transform_0(%arg0: i32) -> (i32, i32) {
    %c0_i32 = arith.constant 0 : i32
    %c0_i32_0 = arith.constant 0 : i32
    return %c0_i32, %arg0 : i32, i32
  }
  func.func @transform_1(%arg0: i32) -> (i32, i32) {
    %c0_i32 = arith.constant 0 : i32
    %c0_i32_0 = arith.constant 0 : i32
    return %c0_i32, %arg0 : i32, i32
  }
  func.func @transform_2(%arg0: i32) -> (i32, i32) {
    %c0_i32 = arith.constant 0 : i32
    %c0_i32_0 = arith.constant 0 : i32
    return %arg0, %c0_i32 : i32, i32
  }
}

</mosaic_0001>

<llo_original>
// kernel: tpu_custom_call.1
$region0: #{tpu_custom_call.1}
  #allocation0 [shape = 'u32[]', space=smem, size = 0x4, offset = 0x4, fixed_abs, tag = 'smem constant byte address 0x4 - core index']
  #allocation1 [shape = 'u32[144,128]{1,0:T(1,128)}', space=vmem, size = 0x12000, scoped, tag = 'internal scratch']
  %s0 = inlined_call_operand.hbm [shape: f32[8,128], index: 0, kind: input, shape index: {}]
  %s1 = inlined_call_operand.vmem [shape: s32[1,128], index: 1, kind: input, shape index: {}]
  %s2 = inlined_call_operand.hbm [shape: f32[1,1], index: 2, kind: output, shape index: {}]
  %s3 = sld [smem:[#allocation0]]
  $region22: #{tpu_custom_call.1} parent=0
    _
  %s5 = ssub.s32 1, %s3
  %s6 = scalar_select 0, %s5, %s3
  $region1: #{tpu_custom_call.1} parent=0
    #allocation2 [shape = 'u8[4096]{0}', space=vmem, size = 0x1000, scoped, tag = 'input window, operand 0, single buffered']
    #allocation3 [shape = 's32[1]{0}', space=sflag, size = 0x4, scoped, tag = 'scoped memory for tpu_custom_call.1']
    #allocation4 [shape = 's32[1]{0}', space=sflag, size = 0x4, scoped, tag = 'scoped memory for tpu_custom_call.1']
    #allocation5 [shape = 'u8[512]{0}', space=smem, size = 0x200, scoped, tag = 'output window, operand 0, single buffered']
    %7 = vsyncpa [#allocation3], 0
    %8 = vsyncpa [#allocation4], 0
    // Predicated region
    $region2: #{tpu_custom_call.1} parent=1 // pred_check
      _
    $region3: #{tpu_custom_call.1} parent=1 // pred_check_branch
      %10 = sbr.rel (0) target = $region5
    $region4: #{tpu_custom_call.1} parent=1 // pred_region
      %s12 = ssub.s32 128, 128
      %13 = vsyncadd [#allocation3], %s12
      %s15 = sshll.u32 [#allocation2], 4
      %s16 = int_to_ptr.vmem [resolvable:$true] %s15
      %18 = dma.hbm_to_vmem [thread:$0]  %s0, 128, %s16, [#allocation3]
    $region5: #{tpu_custom_call.1} parent=1 // pred_fallthru
      _
    // Predicated region
    $region6: #{tpu_custom_call.1} parent=1 // pred_check
      _
    $region7: #{tpu_custom_call.1} parent=1 // pred_check_branch
      %20 = sbr.rel (0) target = $region9
    $region8: #{tpu_custom_call.1} parent=1 // pred_region
      _
    $region9: #{tpu_custom_call.1} parent=1 // pred_fallthru
      _
    // Predicated region
    $region10: #{tpu_custom_call.1} parent=1 // pred_check
      _
    $region11: #{tpu_custom_call.1} parent=1 // pred_check_branch
      %22 = sbr.rel (0) target = $region13
    $region12: #{tpu_custom_call.1} parent=1 // pred_region
      %23 = dma.done [#allocation3], 128
    $region13: #{tpu_custom_call.1} parent=1 // pred_fallthru
      _
    %v24 = vld [vmem:[#allocation2] sm:$0xff]
    %v25 = vld [vmem:[%s1] sm:$0x1]
    %v26 = vlaneseq
    %v27 = vshrl.u32 %v26, 7
    %v28 = vlaneseq
    %v29 = vshrl.u32 %v28, 7
    %v30 = vsub.s32 0, %v29
    %v31 = vrot.slane %v25, %v30
    %vm32 = vcmp.eq.s32.totalorder %v27, %v31
    %v33 = vsel %vm32, 1, 0
    %v34 = vcvt.s32.f32 %v33
    %v35 = vmul.f32 %v24, %v34
    %v36 = vrot.slane %v35, 4
    %v37 = vadd.f32 %v35, %v36
    %v38 = vrot.slane %v37, 2
    %v39 = vadd.f32 %v37, %v38
    %v40 = vrot.slane %v39, 1
    %v41 = vadd.f32 %v39, %v40
    %v42 = vrot.slane %v24, 4
    %v43 = vmax.f32 %v24, %v42
    %v44 = vrot.slane %v43, 2
    %v45 = vmax.f32 %v43, %v44
    %v46 = vrot.slane %v45, 1
    %v47 = vmax.f32 %v45, %v46
    %v48 = vsub.f32 %v24, %v47
    %v49 = vmul.f32 %v48, 1.442695
    %v50 = vpow.pop %v49
    %v51 = vrot.slane %v50, 4
    %v52 = vadd.f32 %v50, %v51
    %v53 = vrot.slane %v52, 2
    %v54 = vadd.f32 %v52, %v53
    %v55 = vrot.slane %v54, 1
    %v56 = vadd.f32 %v54, %v55
    %v57 = vlog2.pop %v56
    %v58 = vmul.f32 %v57, 0.6931472
    %v59 = vadd.f32 %v47, %v58
    %v60 = vsub.f32 %v59, %v41
    %v61 = vsub.f32 0.0, %v60
    %v62 = vmul.f32 %v61, 1.442695
    %v63 = vpow.pop %v62
    %v64 = vsub.f32 1.0, %v63
    %v65 = vmax.f32 %v64, 0.0
    %v66 = vmul.f32 %v65, %v65
    %v67 = vmul.f32 %v66, %v60
    %vm68 = vcmask 1040384
    %v69 = vsel %vm68, %v67, 0.0
    %70 = vadd.xlane.f32.xlu0 %v69
    %v71 = vpop.xlane.xlu0 %70
    %v72 = vrot.slane %v71, 4
    %v73 = vadd.f32 %v71, %v72
    %v74 = vrot.slane %v73, 2
    %v75 = vadd.f32 %v73, %v74
    %v76 = vrot.slane %v75, 1
    %v77 = vadd.f32 %v75, %v76
    %s78 = vtos %v77
    %s79 = scalar_lea.smem [#allocation5], 0
    %80 = sst [smem:[%s79]] %s78
    // Predicated region
    $region14: #{tpu_custom_call.1} parent=1 // pred_check
      _
    $region15: #{tpu_custom_call.1} parent=1 // pred_check_branch
      %82 = sbr.rel (0) target = $region17
    $region16: #{tpu_custom_call.1} parent=1 // pred_region
      %s84 = ssub.s32 16, 16
      %85 = vsyncadd [#allocation4], %s84
      %88 = dma.smem_to_hbm [#allocation5], 16, %s2, [#allocation4]
    $region17: #{tpu_custom_call.1} parent=1 // pred_fallthru
      _
    // Predicated region
    $region18: #{tpu_custom_call.1} parent=1 // pred_check
      _
    $region19: #{tpu_custom_call.1} parent=1 // pred_check_branch
      %90 = sbr.rel (0) target = $region21
    $region20: #{tpu_custom_call.1} parent=1 // pred_region
      %91 = dma.done [#allocation4], 16
    $region21: #{tpu_custom_call.1} parent=1 // pred_fallthru
      _
    %92 = sfence
    %93 = vsyncpa [#allocation3], 1
    %94 = vsyncpa [#allocation4], 1

</llo_original>
